<compile_context>
chip_gen: v6e
topology: v6e:2x2x1
jax: 0.10.0
libtpu: 0.0.40
codegen_flags: <defaults>
</compile_context>

<pallas_src>
import functools

import jax
import jax.numpy as jnp
from jax.experimental import pallas as pl
from jax.experimental.pallas import tpu as pltpu

_LANE = 128      # vreg lane width
_SUBLANE = 8     # f32 sublane count


def _round_up(x, m):
    return (x + m - 1) // m * m


def _pick_row_tile(batch):
    """Row tile (tm) and padded batch that minimize padding waste, tm <= 256."""
    batch8 = _round_up(batch, _SUBLANE)
    if batch8 <= 256:
        return batch8, batch8            # single tile, zero extra padding
    candidates = (256, 128, 64, 32, 16, 8)
    tm = min(candidates, key=lambda t: (_round_up(batch8, t) - batch8, -t))
    return tm, _round_up(batch8, tm)


def _resident_block_spec(block_shape, single_buffer):
    """BlockSpec for an operand with a constant index_map (loaded once)."""
    index_map = lambda *_: (0,) * len(block_shape)
    if single_buffer:
        # It is DMA'd once; a second pipeline buffer would only waste VMEM.
        return pl.BlockSpec(block_shape, index_map, pipeline_mode=pl.Buffered(1))
    return pl.BlockSpec(block_shape, index_map)


def _make_fused_ffn_kernel(num_layers):
    """o = sigmoid(... sigmoid(sigmoid(x@W0+b0)@W1+b1) ... @W_{L-1}+b_{L-1})."""

    def kernel(x_ref, w_ref, b_ref, o_ref):
        # Running activation lives in vregs (f32) for the whole stack.
        h = x_ref[...].astype(jnp.float32)
        for l in range(num_layers):          # static unroll: L is tiny
            acc = jnp.dot(h.astype(jnp.bfloat16), w_ref[l],   # bf16 MXU,
                          preferred_element_type=jnp.float32)  # f32 accumulate
            acc = acc + b_ref[l]             # (1, D) broadcast over rows
            h = 0.5 * (jnp.tanh(0.5 * acc) + 1.0)   # sigmoid, single EUP op
        o_ref[...] = h.astype(o_ref.dtype)

    return kernel


def fused_feedforward(x, w_stacked, b_stacked, output_size,
                      single_buffer_weights=True):
    """Sigmoid-MLP forward: x (B, in) -> (B, output_size), one pallas_call."""
    batch, in_features = x.shape
    num_layers, d_pad, _ = w_stacked.shape

    tm, b_pad = _pick_row_tile(batch)

    # Zero-pad the input into a lane-dense (b_pad, D) slab.
    x_p = jnp.zeros((b_pad, d_pad), x.dtype).at[:batch, :in_features].set(x)

    # VMEM budget: resident weights/biases (+ their pipeline buffers) plus the
    # double-buffered in/out activation tiles, with headroom.
    wb = 1 if single_buffer_weights else 2
    w_bytes = w_stacked.size * w_stacked.dtype.itemsize * wb
    b_bytes = b_stacked.size * b_stacked.dtype.itemsize * wb
    act_bytes = 2 * 2 * tm * d_pad * jnp.dtype(x.dtype).itemsize  # in + out, 2 bufs
    footprint = w_bytes + b_bytes + act_bytes
    vmem_limit = min(max(int(footprint * 1.5) + (2 << 20), 32 << 20), 100 << 20)

    itemsize = jnp.dtype(x.dtype).itemsize
    cost = pl.CostEstimate(
        flops=2 * b_pad * d_pad * d_pad * num_layers,
        transcendentals=b_pad * d_pad * num_layers,
        bytes_accessed=(x_p.size * itemsize
                        + w_stacked.size * w_stacked.dtype.itemsize
                        + b_stacked.size * b_stacked.dtype.itemsize
                        + b_pad * d_pad * itemsize),
    )

    kernel = _make_fused_ffn_kernel(num_layers)
    y_p = pl.pallas_call(
        kernel,
        out_shape=jax.ShapeDtypeStruct((b_pad, d_pad), x.dtype),
        grid=(b_pad // tm,),
        in_specs=[
            # Activation tile walks the batch axis.
            pl.BlockSpec((tm, d_pad), lambda i: (i, 0)),
            # Weights / biases: constant block index -> loaded once, resident.
            _resident_block_spec((num_layers, d_pad, d_pad),
                                 single_buffer_weights),
            _resident_block_spec((num_layers, 1, d_pad),
                                 single_buffer_weights),
        ],
        out_specs=pl.BlockSpec((tm, d_pad), lambda i: (i, 0)),
        compiler_params=pltpu.CompilerParams(
            dimension_semantics=("parallel",),   # shard batch over v7x's 2 TCs
            vmem_limit_bytes=vmem_limit,
        ),
        cost_estimate=cost,
    )(x_p, w_stacked, b_stacked)

    return y_p[:batch, :output_size]


@functools.partial(jax.jit,
                   static_argnames=("output_size", "single_buffer_weights"))
def feedforward_nn(x, w_stacked, b_stacked, output_size,
                   single_buffer_weights=True):
    return fused_feedforward(x, w_stacked, b_stacked, output_size,
                             single_buffer_weights)


def init_feedforward_params(key, input_size, hidden_size, num_layers,
                            output_size):
    """PyTorch-style init; returns raw f32 per-layer params + padded stacks.

    Layer shapes: in->hidden, (num_layers-1) x hidden->hidden, hidden->out.
    Weights are stored pre-transposed as (fan_in, fan_out) so the kernel does a
    plain row-major matmul (PyTorch computes y = x @ W^T + b).  The stacked
    weights are bf16 (MXU operands); biases stay f32 (added on the f32 acc).
    """
    dims = [input_size] + [hidden_size] * num_layers + [output_size]
    d_pad = _round_up(max(dims), _LANE)
    n_total = len(dims) - 1

    raw_params = []
    w_stacked = jnp.zeros((n_total, d_pad, d_pad), jnp.bfloat16)
    b_stacked = jnp.zeros((n_total, 1, d_pad), jnp.float32)
    for i in range(n_total):
        fan_in, fan_out = dims[i], dims[i + 1]
        key, wk, bk = jax.random.split(key, 3)
        bound = 1.0 / float(fan_in) ** 0.5   # PyTorch default Linear init
        w_t = jax.random.uniform(wk, (fan_in, fan_out), jnp.float32,
                                 minval=-bound, maxval=bound)
        b = jax.random.uniform(bk, (fan_out,), jnp.float32,
                               minval=-bound, maxval=bound)
        raw_params.append((w_t, b))
        w_stacked = w_stacked.at[i, :fan_in, :fan_out].set(
            w_t.astype(jnp.bfloat16))
        b_stacked = b_stacked.at[i, 0, :fan_out].set(b)
    return raw_params, w_stacked, b_stacked


def reference_forward(x, raw_params):
    h = x
    for w_t, b in raw_params:
        h = jax.nn.sigmoid(
            jnp.dot(h, w_t, precision=jax.lax.Precision.HIGHEST) + b)
    return h


if __name__ == "__main__":
    # Small, TPU-friendly shapes consistent with the module's forward:
    # x: (batch, input_size) -> (batch, output_size)
    batch = 8
    input_size = 32
    hidden_size = 64
    num_layers = 3
    output_size = 16

    key = jax.random.PRNGKey(0)
    key, xk = jax.random.split(key)
    x = jax.random.normal(xk, (batch, input_size), jnp.float32)

    raw_params, w_stacked, b_stacked = init_feedforward_params(
        key, input_size, hidden_size, num_layers, output_size)

    try:
        y = feedforward_nn(x, w_stacked, b_stacked, output_size)
    except Exception:
        # Fallback for jax/Mosaic builds that reject pl.Buffered(1) on the
        # constant-index weight slab: use default double-buffering instead.
        y = feedforward_nn(x, w_stacked, b_stacked, output_size,
                           single_buffer_weights=False)
    jax.block_until_ready(y)

    # Sanity: correct shape, sigmoid range, and matches a pure-JAX f32
    # reference of the same Linear->Sigmoid stack (tolerance loosened for the
    # bf16 matmul operands; accumulation is still f32).
    y_ref = reference_forward(x, raw_params)
    assert y.shape == (batch, output_size)
    assert bool(jnp.all((y > 0.0) & (y < 1.0)))
    assert bool(jnp.allclose(y, y_ref, atol=2e-2, rtol=2e-2))

    print("KERNEL_OK")
</pallas_src>

<mosaic_0001>
module attributes {stable_mosaic.version = 11 : i64} {
  func.func @kernel(%arg0: i32, %arg1: memref<8x128xf32, #tpu.memory_space<vmem>>, %arg2: memref<4x128x128xbf16, #tpu.memory_space<vmem>>, %arg3: memref<4x1x128xf32, #tpu.memory_space<vmem>>, %arg4: memref<8x128xf32, #tpu.memory_space<vmem>>) attributes {dimension_semantics = [#tpu.dimension_semantics<parallel>], iteration_bounds = array<i64: 1>, scalar_prefetch = 0 : i64, scratch_operands = 0 : i64, tpu.core_type = #tpu.core_type<tc>, window_params = [{transform_indices = @transform_0, window_bounds = array<i64: 8, 128>}, {pipeline_mode = #tpu.pipeline_mode<synchronous>, transform_indices = @transform_1, window_bounds = array<i64: 4, 128, 128>}, {pipeline_mode = #tpu.pipeline_mode<synchronous>, transform_indices = @transform_2, window_bounds = array<i64: 4, 1, 128>}, {transform_indices = @transform_3, window_bounds = array<i64: 8, 128>}]} {
    %c0 = arith.constant 0 : index
    %c0_0 = arith.constant 0 : index
    %0 = vector.load %arg1[%c0, %c0_0] : memref<8x128xf32, #tpu.memory_space<vmem>>, vector<8x128xf32>
    %1 = arith.truncf %0 : vector<8x128xf32> to vector<8x128xbf16>
    %c0_1 = arith.constant 0 : index
    %c0_2 = arith.constant 0 : index
    %c0_3 = arith.constant 0 : index
    %2 = vector.load %arg2[%c0_1, %c0_2, %c0_3] : memref<4x128x128xbf16, #tpu.memory_space<vmem>>, vector<1x128x128xbf16>
    %3 = vector.shape_cast %2 : vector<1x128x128xbf16> to vector<128x128xbf16>
    %cst = arith.constant dense<0.000000e+00> : vector<8x128xf32>
    %4 = tpu.matmul %1, %3, %cst {dimension_numbers = #tpu.dot_dimension_numbers<[1], [0], [0], [1], [0, 0, 1, 1], [], []>} : vector<8x128xbf16>, vector<128x128xbf16>, vector<8x128xf32> -> vector<8x128xf32>
    %c0_4 = arith.constant 0 : index
    %c0_5 = arith.constant 0 : index
    %c0_6 = arith.constant 0 : index
    %5 = vector.load %arg3[%c0_4, %c0_5, %c0_6] : memref<4x1x128xf32, #tpu.memory_space<vmem>>, vector<1x1x128xf32>
    %6 = vector.shape_cast %5 : vector<1x1x128xf32> to vector<1x128xf32>
    %7 = vector.broadcast %6 : vector<1x128xf32> to vector<8x128xf32>
    %8 = arith.addf %4, %7 : vector<8x128xf32>
    %cst_7 = arith.constant 5.000000e-01 : f32
    %9 = vector.broadcast %cst_7 : f32 to vector<8x128xf32>
    %10 = arith.mulf %9, %8 : vector<8x128xf32>
    %11 = math.tanh %10 : vector<8x128xf32>
    %cst_8 = arith.constant 1.000000e+00 : f32
    %12 = vector.broadcast %cst_8 : f32 to vector<8x128xf32>
    %13 = arith.addf %11, %12 : vector<8x128xf32>
    %cst_9 = arith.constant 5.000000e-01 : f32
    %14 = vector.broadcast %cst_9 : f32 to vector<8x128xf32>
    %15 = arith.mulf %14, %13 : vector<8x128xf32>
    %16 = arith.truncf %15 : vector<8x128xf32> to vector<8x128xbf16>
    %c1 = arith.constant 1 : index
    %c0_10 = arith.constant 0 : index
    %c0_11 = arith.constant 0 : index
    %17 = vector.load %arg2[%c1, %c0_10, %c0_11] : memref<4x128x128xbf16, #tpu.memory_space<vmem>>, vector<1x128x128xbf16>
    %18 = vector.shape_cast %17 : vector<1x128x128xbf16> to vector<128x128xbf16>
    %cst_12 = arith.constant dense<0.000000e+00> : vector<8x128xf32>
    %19 = tpu.matmul %16, %18, %cst_12 {dimension_numbers = #tpu.dot_dimension_numbers<[1], [0], [0], [1], [0, 0, 1, 1], [], []>} : vector<8x128xbf16>, vector<128x128xbf16>, vector<8x128xf32> -> vector<8x128xf32>
    %c1_13 = arith.constant 1 : index
    %c0_14 = arith.constant 0 : index
    %c0_15 = arith.constant 0 : index
    %20 = vector.load %arg3[%c1_13, %c0_14, %c0_15] : memref<4x1x128xf32, #tpu.memory_space<vmem>>, vector<1x1x128xf32>
    %21 = vector.shape_cast %20 : vector<1x1x128xf32> to vector<1x128xf32>
    %22 = vector.broadcast %21 : vector<1x128xf32> to vector<8x128xf32>
    %23 = arith.addf %19, %22 : vector<8x128xf32>
    %cst_16 = arith.constant 5.000000e-01 : f32
    %24 = vector.broadcast %cst_16 : f32 to vector<8x128xf32>
    %25 = arith.mulf %24, %23 : vector<8x128xf32>
    %26 = math.tanh %25 : vector<8x128xf32>
    %cst_17 = arith.constant 1.000000e+00 : f32
    %27 = vector.broadcast %cst_17 : f32 to vector<8x128xf32>
    %28 = arith.addf %26, %27 : vector<8x128xf32>
    %cst_18 = arith.constant 5.000000e-01 : f32
    %29 = vector.broadcast %cst_18 : f32 to vector<8x128xf32>
    %30 = arith.mulf %29, %28 : vector<8x128xf32>
    %31 = arith.truncf %30 : vector<8x128xf32> to vector<8x128xbf16>
    %c2 = arith.constant 2 : index
    %c0_19 = arith.constant 0 : index
    %c0_20 = arith.constant 0 : index
    %32 = vector.load %arg2[%c2, %c0_19, %c0_20] : memref<4x128x128xbf16, #tpu.memory_space<vmem>>, vector<1x128x128xbf16>
    %33 = vector.shape_cast %32 : vector<1x128x128xbf16> to vector<128x128xbf16>
    %cst_21 = arith.constant dense<0.000000e+00> : vector<8x128xf32>
    %34 = tpu.matmul %31, %33, %cst_21 {dimension_numbers = #tpu.dot_dimension_numbers<[1], [0], [0], [1], [0, 0, 1, 1], [], []>} : vector<8x128xbf16>, vector<128x128xbf16>, vector<8x128xf32> -> vector<8x128xf32>
    %c2_22 = arith.constant 2 : index
    %c0_23 = arith.constant 0 : index
    %c0_24 = arith.constant 0 : index
    %35 = vector.load %arg3[%c2_22, %c0_23, %c0_24] : memref<4x1x128xf32, #tpu.memory_space<vmem>>, vector<1x1x128xf32>
    %36 = vector.shape_cast %35 : vector<1x1x128xf32> to vector<1x128xf32>
    %37 = vector.broadcast %36 : vector<1x128xf32> to vector<8x128xf32>
    %38 = arith.addf %34, %37 : vector<8x128xf32>
    %cst_25 = arith.constant 5.000000e-01 : f32
    %39 = vector.broadcast %cst_25 : f32 to vector<8x128xf32>
    %40 = arith.mulf %39, %38 : vector<8x128xf32>
    %41 = math.tanh %40 : vector<8x128xf32>
    %cst_26 = arith.constant 1.000000e+00 : f32
    %42 = vector.broadcast %cst_26 : f32 to vector<8x128xf32>
    %43 = arith.addf %41, %42 : vector<8x128xf32>
    %cst_27 = arith.constant 5.000000e-01 : f32
    %44 = vector.broadcast %cst_27 : f32 to vector<8x128xf32>
    %45 = arith.mulf %44, %43 : vector<8x128xf32>
    %46 = arith.truncf %45 : vector<8x128xf32> to vector<8x128xbf16>
    %c3 = arith.constant 3 : index
    %c0_28 = arith.constant 0 : index
    %c0_29 = arith.constant 0 : index
    %47 = vector.load %arg2[%c3, %c0_28, %c0_29] : memref<4x128x128xbf16, #tpu.memory_space<vmem>>, vector<1x128x128xbf16>
    %48 = vector.shape_cast %47 : vector<1x128x128xbf16> to vector<128x128xbf16>
    %cst_30 = arith.constant dense<0.000000e+00> : vector<8x128xf32>
    %49 = tpu.matmul %46, %48, %cst_30 {dimension_numbers = #tpu.dot_dimension_numbers<[1], [0], [0], [1], [0, 0, 1, 1], [], []>} : vector<8x128xbf16>, vector<128x128xbf16>, vector<8x128xf32> -> vector<8x128xf32>
    %c3_31 = arith.constant 3 : index
    %c0_32 = arith.constant 0 : index
    %c0_33 = arith.constant 0 : index
    %50 = vector.load %arg3[%c3_31, %c0_32, %c0_33] : memref<4x1x128xf32, #tpu.memory_space<vmem>>, vector<1x1x128xf32>
    %51 = vector.shape_cast %50 : vector<1x1x128xf32> to vector<1x128xf32>
    %52 = vector.broadcast %51 : vector<1x128xf32> to vector<8x128xf32>
    %53 = arith.addf %49, %52 : vector<8x128xf32>
    %cst_34 = arith.constant 5.000000e-01 : f32
    %54 = vector.broadcast %cst_34 : f32 to vector<8x128xf32>
    %55 = arith.mulf %54, %53 : vector<8x128xf32>
    %56 = math.tanh %55 : vector<8x128xf32>
    %cst_35 = arith.constant 1.000000e+00 : f32
    %57 = vector.broadcast %cst_35 : f32 to vector<8x128xf32>
    %58 = arith.addf %56, %57 : vector<8x128xf32>
    %cst_36 = arith.constant 5.000000e-01 : f32
    %59 = vector.broadcast %cst_36 : f32 to vector<8x128xf32>
    %60 = arith.mulf %59, %58 : vector<8x128xf32>
    %c0_37 = arith.constant 0 : index
    %c0_38 = arith.constant 0 : index
    %61 = vector.load %arg4[%c0_37, %c0_38] : memref<8x128xf32, #tpu.memory_space<vmem>>, vector<8x128xf32>
    tpu.vector_store %arg4[%c0_37, %c0_38], %60 {strides = array<i32>} : memref<8x128xf32, #tpu.memory_space<vmem>>, vector<8x128xf32>,
    return
  }
  func.func @transform_0(%arg0: i32) -> (i32, i32) {
    %c0_i32 = arith.constant 0 : i32
    %c0_i32_0 = arith.constant 0 : i32
    return %arg0, %c0_i32 : i32, i32
  }
  func.func @transform_1(%arg0: i32) -> (i32, i32, i32) {
    %c0_i32 = arith.constant 0 : i32
    %c0_i32_0 = arith.constant 0 : i32
    %c0_i32_1 = arith.constant 0 : i32
    %c0_i32_2 = arith.constant 0 : i32
    return %c0_i32, %c0_i32_0, %c0_i32_1 : i32, i32, i32
  }
  func.func @transform_2(%arg0: i32) -> (i32, i32, i32) {
    %c0_i32 = arith.constant 0 : i32
    %c0_i32_0 = arith.constant 0 : i32
    %c0_i32_1 = arith.constant 0 : i32
    %c0_i32_2 = arith.constant 0 : i32
    return %c0_i32, %c0_i32_0, %c0_i32_1 : i32, i32, i32
  }
  func.func @transform_3(%arg0: i32) -> (i32, i32) {
    %c0_i32 = arith.constant 0 : i32
    %c0_i32_0 = arith.constant 0 : i32
    return %arg0, %c0_i32 : i32, i32
  }
}

module attributes {stable_mosaic.version = 11 : i64} {
  func.func @kernel(%arg0: i32, %arg1: memref<8x128xf32, #tpu.memory_space<vmem>>, %arg2: memref<4x128x128xbf16, #tpu.memory_space<vmem>>, %arg3: memref<4x1x128xf32, #tpu.memory_space<vmem>>, %arg4: memref<8x128xf32, #tpu.memory_space<vmem>>) attributes {dimension_semantics = [#tpu.dimension_semantics<parallel>], iteration_bounds = array<i64: 1>, scalar_prefetch = 0 : i64, scratch_operands = 0 : i64, tpu.core_type = #tpu.core_type<tc>, window_params = [{transform_indices = @transform_0, window_bounds = array<i64: 8, 128>}, {pipeline_mode = #tpu.pipeline_mode<synchronous>, transform_indices = @transform_1, window_bounds = array<i64: 4, 128, 128>}, {pipeline_mode = #tpu.pipeline_mode<synchronous>, transform_indices = @transform_2, window_bounds = array<i64: 4, 1, 128>}, {transform_indices = @transform_3, window_bounds = array<i64: 8, 128>}]} {
    %c0 = arith.constant 0 : index
    %c0_0 = arith.constant 0 : index
    %0 = vector.load %arg1[%c0, %c0_0] : memref<8x128xf32, #tpu.memory_space<vmem>>, vector<8x128xf32>
    %1 = arith.truncf %0 : vector<8x128xf32> to vector<8x128xbf16>
    %c0_1 = arith.constant 0 : index
    %c0_2 = arith.constant 0 : index
    %c0_3 = arith.constant 0 : index
    %2 = vector.load %arg2[%c0_1, %c0_2, %c0_3] : memref<4x128x128xbf16, #tpu.memory_space<vmem>>, vector<1x128x128xbf16>
    %3 = vector.shape_cast %2 : vector<1x128x128xbf16> to vector<128x128xbf16>
    %cst = arith.constant dense<0.000000e+00> : vector<8x128xf32>
    %4 = tpu.matmul %1, %3, %cst {dimension_numbers = #tpu.dot_dimension_numbers<[1], [0], [0], [1], [0, 0, 1, 1], [], []>} : vector<8x128xbf16>, vector<128x128xbf16>, vector<8x128xf32> -> vector<8x128xf32>
    %c0_4 = arith.constant 0 : index
    %c0_5 = arith.constant 0 : index
    %c0_6 = arith.constant 0 : index
    %5 = vector.load %arg3[%c0_4, %c0_5, %c0_6] : memref<4x1x128xf32, #tpu.memory_space<vmem>>, vector<1x1x128xf32>
    %6 = vector.shape_cast %5 : vector<1x1x128xf32> to vector<1x128xf32>
    %7 = vector.broadcast %6 : vector<1x128xf32> to vector<8x128xf32>
    %8 = arith.addf %4, %7 : vector<8x128xf32>
    %cst_7 = arith.constant 5.000000e-01 : f32
    %9 = vector.broadcast %cst_7 : f32 to vector<8x128xf32>
    %10 = arith.mulf %9, %8 : vector<8x128xf32>
    %11 = math.tanh %10 : vector<8x128xf32>
    %cst_8 = arith.constant 1.000000e+00 : f32
    %12 = vector.broadcast %cst_8 : f32 to vector<8x128xf32>
    %13 = arith.addf %11, %12 : vector<8x128xf32>
    %cst_9 = arith.constant 5.000000e-01 : f32
    %14 = vector.broadcast %cst_9 : f32 to vector<8x128xf32>
    %15 = arith.mulf %14, %13 : vector<8x128xf32>
    %16 = arith.truncf %15 : vector<8x128xf32> to vector<8x128xbf16>
    %c1 = arith.constant 1 : index
    %c0_10 = arith.constant 0 : index
    %c0_11 = arith.constant 0 : index
    %17 = vector.load %arg2[%c1, %c0_10, %c0_11] : memref<4x128x128xbf16, #tpu.memory_space<vmem>>, vector<1x128x128xbf16>
    %18 = vector.shape_cast %17 : vector<1x128x128xbf16> to vector<128x128xbf16>
    %cst_12 = arith.constant dense<0.000000e+00> : vector<8x128xf32>
    %19 = tpu.matmul %16, %18, %cst_12 {dimension_numbers = #tpu.dot_dimension_numbers<[1], [0], [0], [1], [0, 0, 1, 1], [], []>} : vector<8x128xbf16>, vector<128x128xbf16>, vector<8x128xf32> -> vector<8x128xf32>
    %c1_13 = arith.constant 1 : index
    %c0_14 = arith.constant 0 : index
    %c0_15 = arith.constant 0 : index
    %20 = vector.load %arg3[%c1_13, %c0_14, %c0_15] : memref<4x1x128xf32, #tpu.memory_space<vmem>>, vector<1x1x128xf32>
    %21 = vector.shape_cast %20 : vector<1x1x128xf32> to vector<1x128xf32>
    %22 = vector.broadcast %21 : vector<1x128xf32> to vector<8x128xf32>
    %23 = arith.addf %19, %22 : vector<8x128xf32>
    %cst_16 = arith.constant 5.000000e-01 : f32
    %24 = vector.broadcast %cst_16 : f32 to vector<8x128xf32>
    %25 = arith.mulf %24, %23 : vector<8x128xf32>
    %26 = math.tanh %25 : vector<8x128xf32>
    %cst_17 = arith.constant 1.000000e+00 : f32
    %27 = vector.broadcast %cst_17 : f32 to vector<8x128xf32>
    %28 = arith.addf %26, %27 : vector<8x128xf32>
    %cst_18 = arith.constant 5.000000e-01 : f32
    %29 = vector.broadcast %cst_18 : f32 to vector<8x128xf32>
    %30 = arith.mulf %29, %28 : vector<8x128xf32>
    %31 = arith.truncf %30 : vector<8x128xf32> to vector<8x128xbf16>
    %c2 = arith.constant 2 : index
    %c0_19 = arith.constant 0 : index
    %c0_20 = arith.constant 0 : index
    %32 = vector.load %arg2[%c2, %c0_19, %c0_20] : memref<4x128x128xbf16, #tpu.memory_space<vmem>>, vector<1x128x128xbf16>
    %33 = vector.shape_cast %32 : vector<1x128x128xbf16> to vector<128x128xbf16>
    %cst_21 = arith.constant dense<0.000000e+00> : vector<8x128xf32>
    %34 = tpu.matmul %31, %33, %cst_21 {dimension_numbers = #tpu.dot_dimension_numbers<[1], [0], [0], [1], [0, 0, 1, 1], [], []>} : vector<8x128xbf16>, vector<128x128xbf16>, vector<8x128xf32> -> vector<8x128xf32>
    %c2_22 = arith.constant 2 : index
    %c0_23 = arith.constant 0 : index
    %c0_24 = arith.constant 0 : index
    %35 = vector.load %arg3[%c2_22, %c0_23, %c0_24] : memref<4x1x128xf32, #tpu.memory_space<vmem>>, vector<1x1x128xf32>
    %36 = vector.shape_cast %35 : vector<1x1x128xf32> to vector<1x128xf32>
    %37 = vector.broadcast %36 : vector<1x128xf32> to vector<8x128xf32>
    %38 = arith.addf %34, %37 : vector<8x128xf32>
    %cst_25 = arith.constant 5.000000e-01 : f32
    %39 = vector.broadcast %cst_25 : f32 to vector<8x128xf32>
    %40 = arith.mulf %39, %38 : vector<8x128xf32>
    %41 = math.tanh %40 : vector<8x128xf32>
    %cst_26 = arith.constant 1.000000e+00 : f32
    %42 = vector.broadcast %cst_26 : f32 to vector<8x128xf32>
    %43 = arith.addf %41, %42 : vector<8x128xf32>
    %cst_27 = arith.constant 5.000000e-01 : f32
    %44 = vector.broadcast %cst_27 : f32 to vector<8x128xf32>
    %45 = arith.mulf %44, %43 : vector<8x128xf32>
    %46 = arith.truncf %45 : vector<8x128xf32> to vector<8x128xbf16>
    %c3 = arith.constant 3 : index
    %c0_28 = arith.constant 0 : index
    %c0_29 = arith.constant 0 : index
    %47 = vector.load %arg2[%c3, %c0_28, %c0_29] : memref<4x128x128xbf16, #tpu.memory_space<vmem>>, vector<1x128x128xbf16>
    %48 = vector.shape_cast %47 : vector<1x128x128xbf16> to vector<128x128xbf16>
    %cst_30 = arith.constant dense<0.000000e+00> : vector<8x128xf32>
    %49 = tpu.matmul %46, %48, %cst_30 {dimension_numbers = #tpu.dot_dimension_numbers<[1], [0], [0], [1], [0, 0, 1, 1], [], []>} : vector<8x128xbf16>, vector<128x128xbf16>, vector<8x128xf32> -> vector<8x128xf32>
    %c3_31 = arith.constant 3 : index
    %c0_32 = arith.constant 0 : index
    %c0_33 = arith.constant 0 : index
    %50 = vector.load %arg3[%c3_31, %c0_32, %c0_33] : memref<4x1x128xf32, #tpu.memory_space<vmem>>, vector<1x1x128xf32>
    %51 = vector.shape_cast %50 : vector<1x1x128xf32> to vector<1x128xf32>
    %52 = vector.broadcast %51 : vector<1x128xf32> to vector<8x128xf32>
    %53 = arith.addf %49, %52 : vector<8x128xf32>
    %cst_34 = arith.constant 5.000000e-01 : f32
    %54 = vector.broadcast %cst_34 : f32 to vector<8x128xf32>
    %55 = arith.mulf %54, %53 : vector<8x128xf32>
    %56 = math.tanh %55 : vector<8x128xf32>
    %cst_35 = arith.constant 1.000000e+00 : f32
    %57 = vector.broadcast %cst_35 : f32 to vector<8x128xf32>
    %58 = arith.addf %56, %57 : vector<8x128xf32>
    %cst_36 = arith.constant 5.000000e-01 : f32
    %59 = vector.broadcast %cst_36 : f32 to vector<8x128xf32>
    %60 = arith.mulf %59, %58 : vector<8x128xf32>
    %c0_37 = arith.constant 0 : index
    %c0_38 = arith.constant 0 : index
    %61 = vector.load %arg4[%c0_37, %c0_38] : memref<8x128xf32, #tpu.memory_space<vmem>>, vector<8x128xf32>
    tpu.vector_store %arg4[%c0_37, %c0_38], %60 {strides = array<i32>} : memref<8x128xf32, #tpu.memory_space<vmem>>, vector<8x128xf32>,
    return
  }
  func.func @transform_0(%arg0: i32) -> (i32, i32) {
    %c0_i32 = arith.constant 0 : i32
    %c0_i32_0 = arith.constant 0 : i32
    return %arg0, %c0_i32 : i32, i32
  }
  func.func @transform_1(%arg0: i32) -> (i32, i32, i32) {
    %c0_i32 = arith.constant 0 : i32
    %c0_i32_0 = arith.constant 0 : i32
    %c0_i32_1 = arith.constant 0 : i32
    %c0_i32_2 = arith.constant 0 : i32
    return %c0_i32, %c0_i32_0, %c0_i32_1 : i32, i32, i32
  }
  func.func @transform_2(%arg0: i32) -> (i32, i32, i32) {
    %c0_i32 = arith.constant 0 : i32
    %c0_i32_0 = arith.constant 0 : i32
    %c0_i32_1 = arith.constant 0 : i32
    %c0_i32_2 = arith.constant 0 : i32
    return %c0_i32, %c0_i32_0, %c0_i32_1 : i32, i32, i32
  }
  func.func @transform_3(%arg0: i32) -> (i32, i32) {
    %c0_i32 = arith.constant 0 : i32
    %c0_i32_0 = arith.constant 0 : i32
    return %arg0, %c0_i32 : i32, i32
  }
}

</mosaic_0001>

<llo_original>
// kernel: feedforward_nn.1
$region0: #{feedforward_nn.1}
  #allocation0 [shape = 'u32[]', space=smem, size = 0x4, offset = 0x4, fixed_abs, tag = 'smem constant byte address 0x4 - core index']
  #allocation1 [shape = 'u32[144,128]{1,0:T(1,128)}', space=vmem, size = 0x12000, scoped, tag = 'internal scratch']
  %s0 = inlined_call_operand.vmem [shape: f32[8,128], index: 0, kind: input, shape index: {}]
  %s1 = inlined_call_operand.hbm [shape: bf16[4,128,128], index: 1, kind: input, shape index: {}]
  %s2 = inlined_call_operand.vmem [shape: f32[4,1,128], index: 2, kind: input, shape index: {}]
  %s3 = inlined_call_operand.hbm [shape: f32[8,128], index: 3, kind: output, shape index: {}]
  %s4 = sld [smem:[#allocation0]]
  $region26: #{feedforward_nn.1} parent=0
    _
  %s6 = ssub.s32 1, %s4
  %s7 = scalar_select 0, %s6, %s4
  $region1: #{feedforward_nn.1} parent=0
    #allocation2 [shape = 'u8[131072]{0}', space=vmem, size = 0x20000, scoped, tag = 'input window, operand 1, single buffered']
    #allocation3 [shape = 's32[1]{0}', space=sflag, size = 0x4, scoped, tag = 'scoped memory for feedforward_nn.1']
    #allocation4 [shape = 's32[1]{0}', space=sflag, size = 0x4, scoped, tag = 'scoped memory for feedforward_nn.1']
    #allocation5 [shape = 'u8[4096]{0}', space=vmem, size = 0x1000, scoped, tag = 'output window, operand 0, single buffered']
    %8 = vsyncpa [#allocation3], 0
    %9 = vsyncpa [#allocation4], 0
    // Predicated region
    $region2: #{feedforward_nn.1} parent=1 // pred_check
      _
    $region3: #{feedforward_nn.1} parent=1 // pred_check_branch
      %11 = sbr.rel (0) target = $region5
    $region4: #{feedforward_nn.1} parent=1 // pred_region
      _
    $region5: #{feedforward_nn.1} parent=1 // pred_fallthru
      _
    // Predicated region
    $region6: #{feedforward_nn.1} parent=1 // pred_check
      _
    $region7: #{feedforward_nn.1} parent=1 // pred_check_branch
      %13 = sbr.rel (0) target = $region9
    $region8: #{feedforward_nn.1} parent=1 // pred_region
      %s15 = ssub.s32 4096, 4096
      %16 = vsyncadd [#allocation3], %s15
      %s17 = sshll.u32 [#allocation2], 4
      %s18 = int_to_ptr.vmem [resolvable:$true] %s17
      %23 = dma.hbm_to_vmem [thread:$0]  %s1, 4096, %s18, [#allocation3], 64, 64, 4
    $region9: #{feedforward_nn.1} parent=1 // pred_fallthru
      _
    // Predicated region
    $region10: #{feedforward_nn.1} parent=1 // pred_check
      _
    $region11: #{feedforward_nn.1} parent=1 // pred_check_branch
      %25 = sbr.rel (0) target = $region13
    $region12: #{feedforward_nn.1} parent=1 // pred_region
      _
    $region13: #{feedforward_nn.1} parent=1 // pred_fallthru
      _
    // Predicated region
    $region14: #{feedforward_nn.1} parent=1 // pred_check
      _
    $region15: #{feedforward_nn.1} parent=1 // pred_check_branch
      %27 = sbr.rel (0) target = $region17
    $region16: #{feedforward_nn.1} parent=1 // pred_region
      %28 = dma.done [#allocation3], 4096
    $region17: #{feedforward_nn.1} parent=1 // pred_fallthru
      _
    %v30 = vld [vmem:[%s0] sm:$0xff]
    %v31 = vpack.c.bf16 %v30, %v30
    %v32 = vld [vmem:[#allocation2] sm:$0xf]
    %v33 = vld [vmem:[#allocation2 + $0x4] sm:$0xf]
    %v34 = vld [vmem:[#allocation2 + $0x8] sm:$0xf]
    %v35 = vld [vmem:[#allocation2 + $0xc] sm:$0xf]
    %v36 = vld [vmem:[#allocation2 + $0x10] sm:$0xf]
    %v37 = vld [vmem:[#allocation2 + $0x14] sm:$0xf]
    %v38 = vld [vmem:[#allocation2 + $0x18] sm:$0xf]
    %v39 = vld [vmem:[#allocation2 + $0x1c] sm:$0xf]
    %v40 = vld [vmem:[#allocation2 + $0x20] sm:$0xf]
    %v41 = vld [vmem:[#allocation2 + $0x24] sm:$0xf]
    %v42 = vld [vmem:[#allocation2 + $0x28] sm:$0xf]
    %v43 = vld [vmem:[#allocation2 + $0x2c] sm:$0xf]
    %v44 = vld [vmem:[#allocation2 + $0x30] sm:$0xf]
    %v45 = vld [vmem:[#allocation2 + $0x34] sm:$0xf]
    %v46 = vld [vmem:[#allocation2 + $0x38] sm:$0xf]
    %v47 = vld [vmem:[#allocation2 + $0x3c] sm:$0xf]
    %v48 = vld [vmem:[%s2] sm:$0x1]
    %v50 = vlaneseq
    %v51 = vshrl.u32 %v50, 7
    %v52 = vsub.s32 0, %v51
    %v53 = vrot.slane %v48, %v52
    %v71 = vunpack.c.l.b16 %v32
    %v72 = vunpack.c.l.b16 %v33
    %v73 = vunpack.c.l.b16 %v34
    %v74 = vunpack.c.l.b16 %v35
    %v75 = vunpack.c.l.b16 %v36
    %v76 = vunpack.c.l.b16 %v37
    %v77 = vunpack.c.l.b16 %v38
    %v78 = vunpack.c.l.b16 %v39
    %v79 = vunpack.c.l.b16 %v40
    %v80 = vunpack.c.l.b16 %v41
    %v81 = vunpack.c.l.b16 %v42
    %v82 = vunpack.c.l.b16 %v43
    %v83 = vunpack.c.l.b16 %v44
    %v84 = vunpack.c.l.b16 %v45
    %v85 = vunpack.c.l.b16 %v46
    %v86 = vunpack.c.l.b16 %v47
    %v87 = vpack.c.b16 %v72, %v71
    %v88 = vpack.c.b16 %v74, %v73
    %v89 = vpack.c.b16 %v76, %v75
    %v90 = vpack.c.b16 %v78, %v77
    %v91 = vpack.c.b16 %v80, %v79
    %v92 = vpack.c.b16 %v82, %v81
    %v93 = vpack.c.b16 %v84, %v83
    %v94 = vpack.c.b16 %v86, %v85
    %103 = vmatprep.subr.bf16.mxu0 0
    %104 = vmatpush1.bf16.msra.mxu0 %v94
    %105 = vmatprep.subr.bf16.mxu0 0
    %106 = vmatpush1.bf16.msra.mxu0 %v93
    %107 = vmatprep.subr.bf16.mxu0 0
    %108 = vmatpush1.bf16.msra.mxu0 %v92
    %109 = vmatprep.subr.bf16.mxu0 0
    %110 = vmatpush1.bf16.msra.mxu0 %v91
    %111 = vmatprep.subr.bf16.mxu0 0
    %112 = vmatpush1.bf16.msra.mxu0 %v90
    %113 = vmatprep.subr.bf16.mxu0 0
    %114 = vmatpush1.bf16.msra.mxu0 %v89
    %115 = vmatprep.subr.bf16.mxu0 0
    %116 = vmatpush1.bf16.msra.mxu0 %v88
    %117 = vmatprep.subr.bf16.mxu0 0
    %118 = vmatpush1.bf16.msra.mxu0 %v87
    %119 = vmatprep.subr.bf16.mxu0 0
    %120 = vmatpush2.bf16.msra.mxu0 0
    %121 = vmatprep.subr.bf16.mxu0 0
    %122 = vmatpush2.bf16.msra.mxu0 0
    %123 = vmatprep.subr.bf16.mxu0 0
    %124 = vmatpush2.bf16.msra.mxu0 0
    %125 = vmatprep.subr.bf16.mxu0 0
    %126 = vmatpush2.bf16.msra.mxu0 0
    %127 = vmatprep.subr.bf16.mxu0 0
    %128 = vmatpush2.bf16.msra.mxu0 0
    %129 = vmatprep.subr.bf16.mxu0 0
    %130 = vmatpush2.bf16.msra.mxu0 0
    %131 = vmatprep.subr.bf16.mxu0 0
    %132 = vmatpush2.bf16.msra.mxu0 0
    %133 = vmatprep.subr.bf16.mxu0 0
    %134 = vmatpush2.bf16.msra.mxu0 0
    %135 = vmatprep.mubr.bf16.mxu0 0
    %136 = vmatmul.mubr.bf16.gmra.mxu0 %v31
    %v137 = vpop.f32.mrf.mxu0
    %v138 = vadd.f32 %v53, %v137
    %v139 = vpop.f32.mrf.mxu0
    %v140 = vpop.f32.mrf.mxu0
    %v141 = vpop.f32.mrf.mxu0
    %142 = vdwg.mxu0
    %v143 = vmul.f32 %v138, 0.5
    %v144 = vtanh.pop %v143
    %v145 = vadd.f32 %v144, 1.0
    %v146 = vmul.f32 %v145, 0.5
    %v147 = vpack.c.bf16 %v146, %v146
    %s148 = scalar_lea.vmem [#allocation2], 64
    %v149 = vld [vmem:[%s148] sm:$0xf]
    %v150 = vld [vmem:[%s148 + $0x4] sm:$0xf]
    %v151 = vld [vmem:[%s148 + $0x8] sm:$0xf]
    %v152 = vld [vmem:[%s148 + $0xc] sm:$0xf]
    %v153 = vld [vmem:[%s148 + $0x10] sm:$0xf]
    %v154 = vld [vmem:[%s148 + $0x14] sm:$0xf]
    %v155 = vld [vmem:[%s148 + $0x18] sm:$0xf]
    %v156 = vld [vmem:[%s148 + $0x1c] sm:$0xf]
    %v157 = vld [vmem:[%s148 + $0x20] sm:$0xf]
    %v158 = vld [vmem:[%s148 + $0x24] sm:$0xf]
    %v159 = vld [vmem:[%s148 + $0x28] sm:$0xf]
    %v160 = vld [vmem:[%s148 + $0x2c] sm:$0xf]
    %v161 = vld [vmem:[%s148 + $0x30] sm:$0xf]
    %v162 = vld [vmem:[%s148 + $0x34] sm:$0xf]
    %v163 = vld [vmem:[%s148 + $0x38] sm:$0xf]
    %v164 = vld [vmem:[%s148 + $0x3c] sm:$0xf]
    %s165 = scalar_lea.vmem %s2, 1
    %v166 = vld [vmem:[%s165] sm:$0x1]
    %v168 = vlaneseq
    %v169 = vshrl.u32 %v168, 7
    %v170 = vsub.s32 0, %v169
    %v171 = vrot.slane %v166, %v170
    %v189 = vunpack.c.l.b16 %v149
    %v190 = vunpack.c.l.b16 %v150
    %v191 = vunpack.c.l.b16 %v151
    %v192 = vunpack.c.l.b16 %v152
    %v193 = vunpack.c.l.b16 %v153
    %v194 = vunpack.c.l.b16 %v154
    %v195 = vunpack.c.l.b16 %v155
    %v196 = vunpack.c.l.b16 %v156
    %v197 = vunpack.c.l.b16 %v157
    %v198 = vunpack.c.l.b16 %v158
    %v199 = vunpack.c.l.b16 %v159
    %v200 = vunpack.c.l.b16 %v160
    %v201 = vunpack.c.l.b16 %v161
    %v202 = vunpack.c.l.b16 %v162
    %v203 = vunpack.c.l.b16 %v163
    %v204 = vunpack.c.l.b16 %v164
    %v205 = vpack.c.b16 %v190, %v189
    %v206 = vpack.c.b16 %v192, %v191
    %v207 = vpack.c.b16 %v194, %v193
    %v208 = vpack.c.b16 %v196, %v195
    %v209 = vpack.c.b16 %v198, %v197
    %v210 = vpack.c.b16 %v200, %v199
    %v211 = vpack.c.b16 %v202, %v201
    %v212 = vpack.c.b16 %v204, %v203
    %221 = vmatprep.subr.bf16.mxu0 0
    %222 = vmatpush1.bf16.msra.mxu0 %v212
    %223 = vmatprep.subr.bf16.mxu0 0
    %224 = vmatpush1.bf16.msra.mxu0 %v211
    %225 = vmatprep.subr.bf16.mxu0 0
    %226 = vmatpush1.bf16.msra.mxu0 %v210
    %227 = vmatprep.subr.bf16.mxu0 0
    %228 = vmatpush1.bf16.msra.mxu0 %v209
    %229 = vmatprep.subr.bf16.mxu0 0
    %230 = vmatpush1.bf16.msra.mxu0 %v208
    %231 = vmatprep.subr.bf16.mxu0 0
    %232 = vmatpush1.bf16.msra.mxu0 %v207
    %233 = vmatprep.subr.bf16.mxu0 0
    %234 = vmatpush1.bf16.msra.mxu0 %v206
    %235 = vmatprep.subr.bf16.mxu0 0
    %236 = vmatpush1.bf16.msra.mxu0 %v205
    %237 = vmatprep.subr.bf16.mxu0 0
    %238 = vmatpush2.bf16.msra.mxu0 0
    %239 = vmatprep.subr.bf16.mxu0 0
    %240 = vmatpush2.bf16.msra.mxu0 0
    %241 = vmatprep.subr.bf16.mxu0 0
    %242 = vmatpush2.bf16.msra.mxu0 0
    %243 = vmatprep.subr.bf16.mxu0 0
    %244 = vmatpush2.bf16.msra.mxu0 0
    %245 = vmatprep.subr.bf16.mxu0 0
    %246 = vmatpush2.bf16.msra.mxu0 0
    %247 = vmatprep.subr.bf16.mxu0 0
    %248 = vmatpush2.bf16.msra.mxu0 0
    %249 = vmatprep.subr.bf16.mxu0 0
    %250 = vmatpush2.bf16.msra.mxu0 0
    %251 = vmatprep.subr.bf16.mxu0 0
    %252 = vmatpush2.bf16.msra.mxu0 0
    %253 = vmatprep.mubr.bf16.mxu0 0
    %254 = vmatmul.mubr.bf16.gmra.mxu0 %v147
    %v255 = vpop.f32.mrf.mxu0
    %v256 = vadd.f32 %v171, %v255
    %v257 = vpop.f32.mrf.mxu0
    %v258 = vpop.f32.mrf.mxu0
    %v259 = vpop.f32.mrf.mxu0
    %260 = vdwg.mxu0
    %v261 = vmul.f32 %v256, 0.5
    %v262 = vtanh.pop %v261
    %v263 = vadd.f32 %v262, 1.0
    %v264 = vmul.f32 %v263, 0.5
    %v265 = vpack.c.bf16 %v264, %v264
    %s266 = scalar_lea.vmem [#allocation2], 128
    %v267 = vld [vmem:[%s266] sm:$0xf]
    %v268 = vld [vmem:[%s266 + $0x4] sm:$0xf]
    %v269 = vld [vmem:[%s266 + $0x8] sm:$0xf]
    %v270 = vld [vmem:[%s266 + $0xc] sm:$0xf]
    %v271 = vld [vmem:[%s266 + $0x10] sm:$0xf]
    %v272 = vld [vmem:[%s266 + $0x14] sm:$0xf]
    %v273 = vld [vmem:[%s266 + $0x18] sm:$0xf]
    %v274 = vld [vmem:[%s266 + $0x1c] sm:$0xf]
    %v275 = vld [vmem:[%s266 + $0x20] sm:$0xf]
    %v276 = vld [vmem:[%s266 + $0x24] sm:$0xf]
    %v277 = vld [vmem:[%s266 + $0x28] sm:$0xf]
    %v278 = vld [vmem:[%s266 + $0x2c] sm:$0xf]
    %v279 = vld [vmem:[%s266 + $0x30] sm:$0xf]
    %v280 = vld [vmem:[%s266 + $0x34] sm:$0xf]
    %v281 = vld [vmem:[%s266 + $0x38] sm:$0xf]
    %v282 = vld [vmem:[%s266 + $0x3c] sm:$0xf]
    %s283 = scalar_lea.vmem %s2, 2
    %v284 = vld [vmem:[%s283] sm:$0x1]
    %v286 = vlaneseq
    %v287 = vshrl.u32 %v286, 7
    %v288 = vsub.s32 0, %v287
    %v289 = vrot.slane %v284, %v288
    %v307 = vunpack.c.l.b16 %v267
    %v308 = vunpack.c.l.b16 %v268
    %v309 = vunpack.c.l.b16 %v269
    %v310 = vunpack.c.l.b16 %v270
    %v311 = vunpack.c.l.b16 %v271
    %v312 = vunpack.c.l.b16 %v272
    %v313 = vunpack.c.l.b16 %v273
    %v314 = vunpack.c.l.b16 %v274
    %v315 = vunpack.c.l.b16 %v275
    %v316 = vunpack.c.l.b16 %v276
    %v317 = vunpack.c.l.b16 %v277
    %v318 = vunpack.c.l.b16 %v278
    %v319 = vunpack.c.l.b16 %v279
    %v320 = vunpack.c.l.b16 %v280
    %v321 = vunpack.c.l.b16 %v281
    %v322 = vunpack.c.l.b16 %v282
    %v323 = vpack.c.b16 %v308, %v307
    %v324 = vpack.c.b16 %v310, %v309
    %v325 = vpack.c.b16 %v312, %v311
    %v326 = vpack.c.b16 %v314, %v313
    %v327 = vpack.c.b16 %v316, %v315
    %v328 = vpack.c.b16 %v318, %v317
    %v329 = vpack.c.b16 %v320, %v319
    %v330 = vpack.c.b16 %v322, %v321
    %339 = vmatprep.subr.bf16.mxu0 0
    %340 = vmatpush1.bf16.msra.mxu0 %v330
    %341 = vmatprep.subr.bf16.mxu0 0
    %342 = vmatpush1.bf16.msra.mxu0 %v329
    %343 = vmatprep.subr.bf16.mxu0 0
    %344 = vmatpush1.bf16.msra.mxu0 %v328
    %345 = vmatprep.subr.bf16.mxu0 0
    %346 = vmatpush1.bf16.msra.mxu0 %v327
    %347 = vmatprep.subr.bf16.mxu0 0
    %348 = vmatpush1.bf16.msra.mxu0 %v326
    %349 = vmatprep.subr.bf16.mxu0 0
    %350 = vmatpush1.bf16.msra.mxu0 %v325
    %351 = vmatprep.subr.bf16.mxu0 0
    %352 = vmatpush1.bf16.msra.mxu0 %v324
    %353 = vmatprep.subr.bf16.mxu0 0
    %354 = vmatpush1.bf16.msra.mxu0 %v323
    %355 = vmatprep.subr.bf16.mxu0 0
    %356 = vmatpush2.bf16.msra.mxu0 0
    %357 = vmatprep.subr.bf16.mxu0 0
    %358 = vmatpush2.bf16.msra.mxu0 0
    %359 = vmatprep.subr.bf16.mxu0 0
    %360 = vmatpush2.bf16.msra.mxu0 0
    %361 = vmatprep.subr.bf16.mxu0 0
    %362 = vmatpush2.bf16.msra.mxu0 0
    %363 = vmatprep.subr.bf16.mxu0 0
    %364 = vmatpush2.bf16.msra.mxu0 0
    %365 = vmatprep.subr.bf16.mxu0 0
    %366 = vmatpush2.bf16.msra.mxu0 0
    %367 = vmatprep.subr.bf16.mxu0 0
    %368 = vmatpush2.bf16.msra.mxu0 0
    %369 = vmatprep.subr.bf16.mxu0 0
    %370 = vmatpush2.bf16.msra.mxu0 0
    %371 = vmatprep.mubr.bf16.mxu0 0
    %372 = vmatmul.mubr.bf16.gmra.mxu0 %v265
    %v373 = vpop.f32.mrf.mxu0
    %v374 = vadd.f32 %v289, %v373
    %v375 = vpop.f32.mrf.mxu0
    %v376 = vpop.f32.mrf.mxu0
    %v377 = vpop.f32.mrf.mxu0
    %378 = vdwg.mxu0
    %v379 = vmul.f32 %v374, 0.5
    %v380 = vtanh.pop %v379
    %v381 = vadd.f32 %v380, 1.0
    %v382 = vmul.f32 %v381, 0.5
    %v383 = vpack.c.bf16 %v382, %v382
    %s384 = scalar_lea.vmem [#allocation2], 192
    %v385 = vld [vmem:[%s384] sm:$0xf]
    %v386 = vld [vmem:[%s384 + $0x4] sm:$0xf]
    %v387 = vld [vmem:[%s384 + $0x8] sm:$0xf]
    %v388 = vld [vmem:[%s384 + $0xc] sm:$0xf]
    %v389 = vld [vmem:[%s384 + $0x10] sm:$0xf]
    %v390 = vld [vmem:[%s384 + $0x14] sm:$0xf]
    %v391 = vld [vmem:[%s384 + $0x18] sm:$0xf]
    %v392 = vld [vmem:[%s384 + $0x1c] sm:$0xf]
    %v393 = vld [vmem:[%s384 + $0x20] sm:$0xf]
    %v394 = vld [vmem:[%s384 + $0x24] sm:$0xf]
    %v395 = vld [vmem:[%s384 + $0x28] sm:$0xf]
    %v396 = vld [vmem:[%s384 + $0x2c] sm:$0xf]
    %v397 = vld [vmem:[%s384 + $0x30] sm:$0xf]
    %v398 = vld [vmem:[%s384 + $0x34] sm:$0xf]
    %v399 = vld [vmem:[%s384 + $0x38] sm:$0xf]
    %v400 = vld [vmem:[%s384 + $0x3c] sm:$0xf]
    %s401 = scalar_lea.vmem %s2, 3
    %v402 = vld [vmem:[%s401] sm:$0x1]
    %v404 = vlaneseq
    %v405 = vshrl.u32 %v404, 7
    %v406 = vsub.s32 0, %v405
    %v407 = vrot.slane %v402, %v406
    %v425 = vunpack.c.l.b16 %v385
    %v426 = vunpack.c.l.b16 %v386
    %v427 = vunpack.c.l.b16 %v387
    %v428 = vunpack.c.l.b16 %v388
    %v429 = vunpack.c.l.b16 %v389
    %v430 = vunpack.c.l.b16 %v390
    %v431 = vunpack.c.l.b16 %v391
    %v432 = vunpack.c.l.b16 %v392
    %v433 = vunpack.c.l.b16 %v393
    %v434 = vunpack.c.l.b16 %v394
    %v435 = vunpack.c.l.b16 %v395
    %v436 = vunpack.c.l.b16 %v396
    %v437 = vunpack.c.l.b16 %v397
    %v438 = vunpack.c.l.b16 %v398
    %v439 = vunpack.c.l.b16 %v399
    %v440 = vunpack.c.l.b16 %v400
    %v441 = vpack.c.b16 %v426, %v425
    %v442 = vpack.c.b16 %v428, %v427
    %v443 = vpack.c.b16 %v430, %v429
    %v444 = vpack.c.b16 %v432, %v431
    %v445 = vpack.c.b16 %v434, %v433
    %v446 = vpack.c.b16 %v436, %v435
    %v447 = vpack.c.b16 %v438, %v437
    %v448 = vpack.c.b16 %v440, %v439
    %457 = vmatprep.subr.bf16.mxu0 0
    %458 = vmatpush1.bf16.msra.mxu0 %v448
    %459 = vmatprep.subr.bf16.mxu0 0
    %460 = vmatpush1.bf16.msra.mxu0 %v447
    %461 = vmatprep.subr.bf16.mxu0 0
    %462 = vmatpush1.bf16.msra.mxu0 %v446
    %463 = vmatprep.subr.bf16.mxu0 0
    %464 = vmatpush1.bf16.msra.mxu0 %v445
    %465 = vmatprep.subr.bf16.mxu0 0
    %466 = vmatpush1.bf16.msra.mxu0 %v444
    %467 = vmatprep.subr.bf16.mxu0 0
    %468 = vmatpush1.bf16.msra.mxu0 %v443
    %469 = vmatprep.subr.bf16.mxu0 0
    %470 = vmatpush1.bf16.msra.mxu0 %v442
    %471 = vmatprep.subr.bf16.mxu0 0
    %472 = vmatpush1.bf16.msra.mxu0 %v441
    %473 = vmatprep.subr.bf16.mxu0 0
    %474 = vmatpush2.bf16.msra.mxu0 0
    %475 = vmatprep.subr.bf16.mxu0 0
    %476 = vmatpush2.bf16.msra.mxu0 0
    %477 = vmatprep.subr.bf16.mxu0 0
    %478 = vmatpush2.bf16.msra.mxu0 0
    %479 = vmatprep.subr.bf16.mxu0 0
    %480 = vmatpush2.bf16.msra.mxu0 0
    %481 = vmatprep.subr.bf16.mxu0 0
    %482 = vmatpush2.bf16.msra.mxu0 0
    %483 = vmatprep.subr.bf16.mxu0 0
    %484 = vmatpush2.bf16.msra.mxu0 0
    %485 = vmatprep.subr.bf16.mxu0 0
    %486 = vmatpush2.bf16.msra.mxu0 0
    %487 = vmatprep.subr.bf16.mxu0 0
    %488 = vmatpush2.bf16.msra.mxu0 0
    %489 = vmatprep.mubr.bf16.mxu0 0
    %490 = vmatmul.mubr.bf16.gmra.mxu0 %v383
    %v491 = vpop.f32.mrf.mxu0
    %v492 = vadd.f32 %v407, %v491
    %v493 = vpop.f32.mrf.mxu0
    %v494 = vpop.f32.mrf.mxu0
    %v495 = vpop.f32.mrf.mxu0
    %496 = vdwg.mxu0
    %v497 = vmul.f32 %v492, 0.5
    %v498 = vtanh.pop %v497
    %v499 = vadd.f32 %v498, 1.0
    %v500 = vmul.f32 %v499, 0.5
    %501 = vst [vmem:[#allocation5] sm:$0xff] %v500
    // Predicated region
    $region18: #{feedforward_nn.1} parent=1 // pred_check
      _
    $region19: #{feedforward_nn.1} parent=1 // pred_check_branch
      %503 = sbr.rel (0) target = $region21
    $region20: #{feedforward_nn.1} parent=1 // pred_region
      %s505 = ssub.s32 128, 128
      %506 = vsyncadd [#allocation4], %s505
      %s508 = sshll.u32 [#allocation5], 4
      %s509 = int_to_ptr.vmem [resolvable:$true] %s508
      %511 = dma.vmem_to_hbm [thread:$0]  %s509, 128, %s3, [#allocation4]
    $region21: #{feedforward_nn.1} parent=1 // pred_fallthru
      _
    // Predicated region
    $region22: #{feedforward_nn.1} parent=1 // pred_check
      _
    $region23: #{feedforward_nn.1} parent=1 // pred_check_branch
      %513 = sbr.rel (0) target = $region25
    $region24: #{feedforward_nn.1} parent=1 // pred_region
      %514 = dma.done [#allocation4], 128
    $region25: #{feedforward_nn.1} parent=1 // pred_fallthru
      _
    %515 = vsyncpa [#allocation3], 1
    %516 = vsyncpa [#allocation4], 1

// kernel: feedforward_nn.1
$region0: #{feedforward_nn.1}
  #allocation0 [shape = 'u32[]', space=smem, size = 0x4, offset = 0x4, fixed_abs, tag = 'smem constant byte address 0x4 - core index']
  #allocation1 [shape = 'u32[144,128]{1,0:T(1,128)}', space=vmem, size = 0x12000, scoped, tag = 'internal scratch']
  %s0 = inlined_call_operand.vmem [shape: f32[8,128], index: 0, kind: input, shape index: {}]
  %s1 = inlined_call_operand.hbm [shape: bf16[4,128,128], index: 1, kind: input, shape index: {}]
  %s2 = inlined_call_operand.vmem [shape: f32[4,1,128], index: 2, kind: input, shape index: {}]
  %s3 = inlined_call_operand.hbm [shape: f32[8,128], index: 3, kind: output, shape index: {}]
  %s4 = sld [smem:[#allocation0]]
  $region26: #{feedforward_nn.1} parent=0
    _
  %s6 = ssub.s32 1, %s4
  %s7 = scalar_select 0, %s6, %s4
  $region1: #{feedforward_nn.1} parent=0
    #allocation2 [shape = 'u8[131072]{0}', space=vmem, size = 0x20000, scoped, tag = 'input window, operand 1, single buffered']
    #allocation3 [shape = 's32[1]{0}', space=sflag, size = 0x4, scoped, tag = 'scoped memory for feedforward_nn.1']
    #allocation4 [shape = 's32[1]{0}', space=sflag, size = 0x4, scoped, tag = 'scoped memory for feedforward_nn.1']
    #allocation5 [shape = 'u8[4096]{0}', space=vmem, size = 0x1000, scoped, tag = 'output window, operand 0, single buffered']
    %8 = vsyncpa [#allocation3], 0
    %9 = vsyncpa [#allocation4], 0
    // Predicated region
    $region2: #{feedforward_nn.1} parent=1 // pred_check
      _
    $region3: #{feedforward_nn.1} parent=1 // pred_check_branch
      %11 = sbr.rel (0) target = $region5
    $region4: #{feedforward_nn.1} parent=1 // pred_region
      _
    $region5: #{feedforward_nn.1} parent=1 // pred_fallthru
      _
    // Predicated region
    $region6: #{feedforward_nn.1} parent=1 // pred_check
      _
    $region7: #{feedforward_nn.1} parent=1 // pred_check_branch
      %13 = sbr.rel (0) target = $region9
    $region8: #{feedforward_nn.1} parent=1 // pred_region
      %s15 = ssub.s32 4096, 4096
      %16 = vsyncadd [#allocation3], %s15
      %s17 = sshll.u32 [#allocation2], 4
      %s18 = int_to_ptr.vmem [resolvable:$true] %s17
      %23 = dma.hbm_to_vmem [thread:$0]  %s1, 4096, %s18, [#allocation3], 64, 64, 4
    $region9: #{feedforward_nn.1} parent=1 // pred_fallthru
      _
    // Predicated region
    $region10: #{feedforward_nn.1} parent=1 // pred_check
      _
    $region11: #{feedforward_nn.1} parent=1 // pred_check_branch
      %25 = sbr.rel (0) target = $region13
    $region12: #{feedforward_nn.1} parent=1 // pred_region
      _
    $region13: #{feedforward_nn.1} parent=1 // pred_fallthru
      _
    // Predicated region
    $region14: #{feedforward_nn.1} parent=1 // pred_check
      _
    $region15: #{feedforward_nn.1} parent=1 // pred_check_branch
      %27 = sbr.rel (0) target = $region17
    $region16: #{feedforward_nn.1} parent=1 // pred_region
      %28 = dma.done [#allocation3], 4096
    $region17: #{feedforward_nn.1} parent=1 // pred_fallthru
      _
    %v30 = vld [vmem:[%s0] sm:$0xff]
    %v31 = vpack.c.bf16 %v30, %v30
    %v32 = vld [vmem:[#allocation2] sm:$0xf]
    %v33 = vld [vmem:[#allocation2 + $0x4] sm:$0xf]
    %v34 = vld [vmem:[#allocation2 + $0x8] sm:$0xf]
    %v35 = vld [vmem:[#allocation2 + $0xc] sm:$0xf]
    %v36 = vld [vmem:[#allocation2 + $0x10] sm:$0xf]
    %v37 = vld [vmem:[#allocation2 + $0x14] sm:$0xf]
    %v38 = vld [vmem:[#allocation2 + $0x18] sm:$0xf]
    %v39 = vld [vmem:[#allocation2 + $0x1c] sm:$0xf]
    %v40 = vld [vmem:[#allocation2 + $0x20] sm:$0xf]
    %v41 = vld [vmem:[#allocation2 + $0x24] sm:$0xf]
    %v42 = vld [vmem:[#allocation2 + $0x28] sm:$0xf]
    %v43 = vld [vmem:[#allocation2 + $0x2c] sm:$0xf]
    %v44 = vld [vmem:[#allocation2 + $0x30] sm:$0xf]
    %v45 = vld [vmem:[#allocation2 + $0x34] sm:$0xf]
    %v46 = vld [vmem:[#allocation2 + $0x38] sm:$0xf]
    %v47 = vld [vmem:[#allocation2 + $0x3c] sm:$0xf]
    %v48 = vld [vmem:[%s2] sm:$0x1]
    %v50 = vlaneseq
    %v51 = vshrl.u32 %v50, 7
    %v52 = vsub.s32 0, %v51
    %v53 = vrot.slane %v48, %v52
    %v71 = vunpack.c.l.b16 %v32
    %v72 = vunpack.c.l.b16 %v33
    %v73 = vunpack.c.l.b16 %v34
    %v74 = vunpack.c.l.b16 %v35
    %v75 = vunpack.c.l.b16 %v36
    %v76 = vunpack.c.l.b16 %v37
    %v77 = vunpack.c.l.b16 %v38
    %v78 = vunpack.c.l.b16 %v39
    %v79 = vunpack.c.l.b16 %v40
    %v80 = vunpack.c.l.b16 %v41
    %v81 = vunpack.c.l.b16 %v42
    %v82 = vunpack.c.l.b16 %v43
    %v83 = vunpack.c.l.b16 %v44
    %v84 = vunpack.c.l.b16 %v45
    %v85 = vunpack.c.l.b16 %v46
    %v86 = vunpack.c.l.b16 %v47
    %v87 = vpack.c.b16 %v72, %v71
    %v88 = vpack.c.b16 %v74, %v73
    %v89 = vpack.c.b16 %v76, %v75
    %v90 = vpack.c.b16 %v78, %v77
    %v91 = vpack.c.b16 %v80, %v79
    %v92 = vpack.c.b16 %v82, %v81
    %v93 = vpack.c.b16 %v84, %v83
    %v94 = vpack.c.b16 %v86, %v85
    %103 = vmatprep.subr.bf16.mxu0 0
    %104 = vmatpush1.bf16.msra.mxu0 %v94
    %105 = vmatprep.subr.bf16.mxu0 0
    %106 = vmatpush1.bf16.msra.mxu0 %v93
    %107 = vmatprep.subr.bf16.mxu0 0
    %108 = vmatpush1.bf16.msra.mxu0 %v92
    %109 = vmatprep.subr.bf16.mxu0 0
    %110 = vmatpush1.bf16.msra.mxu0 %v91
    %111 = vmatprep.subr.bf16.mxu0 0
    %112 = vmatpush1.bf16.msra.mxu0 %v90
    %113 = vmatprep.subr.bf16.mxu0 0
    %114 = vmatpush1.bf16.msra.mxu0 %v89
    %115 = vmatprep.subr.bf16.mxu0 0
    %116 = vmatpush1.bf16.msra.mxu0 %v88
    %117 = vmatprep.subr.bf16.mxu0 0
    %118 = vmatpush1.bf16.msra.mxu0 %v87
    %119 = vmatprep.subr.bf16.mxu0 0
    %120 = vmatpush2.bf16.msra.mxu0 0
    %121 = vmatprep.subr.bf16.mxu0 0
    %122 = vmatpush2.bf16.msra.mxu0 0
    %123 = vmatprep.subr.bf16.mxu0 0
    %124 = vmatpush2.bf16.msra.mxu0 0
    %125 = vmatprep.subr.bf16.mxu0 0
    %126 = vmatpush2.bf16.msra.mxu0 0
    %127 = vmatprep.subr.bf16.mxu0 0
    %128 = vmatpush2.bf16.msra.mxu0 0
    %129 = vmatprep.subr.bf16.mxu0 0
    %130 = vmatpush2.bf16.msra.mxu0 0
    %131 = vmatprep.subr.bf16.mxu0 0
    %132 = vmatpush2.bf16.msra.mxu0 0
    %133 = vmatprep.subr.bf16.mxu0 0
    %134 = vmatpush2.bf16.msra.mxu0 0
    %135 = vmatprep.mubr.bf16.mxu0 0
    %136 = vmatmul.mubr.bf16.gmra.mxu0 %v31
    %v137 = vpop.f32.mrf.mxu0
    %v138 = vadd.f32 %v53, %v137
    %v139 = vpop.f32.mrf.mxu0
    %v140 = vpop.f32.mrf.mxu0
    %v141 = vpop.f32.mrf.mxu0
    %142 = vdwg.mxu0
    %v143 = vmul.f32 %v138, 0.5
    %v144 = vtanh.pop %v143
    %v145 = vadd.f32 %v144, 1.0
    %v146 = vmul.f32 %v145, 0.5
    %v147 = vpack.c.bf16 %v146, %v146
    %s148 = scalar_lea.vmem [#allocation2], 64
    %v149 = vld [vmem:[%s148] sm:$0xf]
    %v150 = vld [vmem:[%s148 + $0x4] sm:$0xf]
    %v151 = vld [vmem:[%s148 + $0x8] sm:$0xf]
    %v152 = vld [vmem:[%s148 + $0xc] sm:$0xf]
    %v153 = vld [vmem:[%s148 + $0x10] sm:$0xf]
    %v154 = vld [vmem:[%s148 + $0x14] sm:$0xf]
    %v155 = vld [vmem:[%s148 + $0x18] sm:$0xf]
    %v156 = vld [vmem:[%s148 + $0x1c] sm:$0xf]
    %v157 = vld [vmem:[%s148 + $0x20] sm:$0xf]
    %v158 = vld [vmem:[%s148 + $0x24] sm:$0xf]
    %v159 = vld [vmem:[%s148 + $0x28] sm:$0xf]
    %v160 = vld [vmem:[%s148 + $0x2c] sm:$0xf]
    %v161 = vld [vmem:[%s148 + $0x30] sm:$0xf]
    %v162 = vld [vmem:[%s148 + $0x34] sm:$0xf]
    %v163 = vld [vmem:[%s148 + $0x38] sm:$0xf]
    %v164 = vld [vmem:[%s148 + $0x3c] sm:$0xf]
    %s165 = scalar_lea.vmem %s2, 1
    %v166 = vld [vmem:[%s165] sm:$0x1]
    %v168 = vlaneseq
    %v169 = vshrl.u32 %v168, 7
    %v170 = vsub.s32 0, %v169
    %v171 = vrot.slane %v166, %v170
    %v189 = vunpack.c.l.b16 %v149
    %v190 = vunpack.c.l.b16 %v150
    %v191 = vunpack.c.l.b16 %v151
    %v192 = vunpack.c.l.b16 %v152
    %v193 = vunpack.c.l.b16 %v153
    %v194 = vunpack.c.l.b16 %v154
    %v195 = vunpack.c.l.b16 %v155
    %v196 = vunpack.c.l.b16 %v156
    %v197 = vunpack.c.l.b16 %v157
    %v198 = vunpack.c.l.b16 %v158
    %v199 = vunpack.c.l.b16 %v159
    %v200 = vunpack.c.l.b16 %v160
    %v201 = vunpack.c.l.b16 %v161
    %v202 = vunpack.c.l.b16 %v162
    %v203 = vunpack.c.l.b16 %v163
    %v204 = vunpack.c.l.b16 %v164
    %v205 = vpack.c.b16 %v190, %v189
    %v206 = vpack.c.b16 %v192, %v191
    %v207 = vpack.c.b16 %v194, %v193
    %v208 = vpack.c.b16 %v196, %v195
    %v209 = vpack.c.b16 %v198, %v197
    %v210 = vpack.c.b16 %v200, %v199
    %v211 = vpack.c.b16 %v202, %v201
    %v212 = vpack.c.b16 %v204, %v203
    %221 = vmatprep.subr.bf16.mxu0 0
    %222 = vmatpush1.bf16.msra.mxu0 %v212
    %223 = vmatprep.subr.bf16.mxu0 0
    %224 = vmatpush1.bf16.msra.mxu0 %v211
    %225 = vmatprep.subr.bf16.mxu0 0
    %226 = vmatpush1.bf16.msra.mxu0 %v210
    %227 = vmatprep.subr.bf16.mxu0 0
    %228 = vmatpush1.bf16.msra.mxu0 %v209
    %229 = vmatprep.subr.bf16.mxu0 0
    %230 = vmatpush1.bf16.msra.mxu0 %v208
    %231 = vmatprep.subr.bf16.mxu0 0
    %232 = vmatpush1.bf16.msra.mxu0 %v207
    %233 = vmatprep.subr.bf16.mxu0 0
    %234 = vmatpush1.bf16.msra.mxu0 %v206
    %235 = vmatprep.subr.bf16.mxu0 0
    %236 = vmatpush1.bf16.msra.mxu0 %v205
    %237 = vmatprep.subr.bf16.mxu0 0
    %238 = vmatpush2.bf16.msra.mxu0 0
    %239 = vmatprep.subr.bf16.mxu0 0
    %240 = vmatpush2.bf16.msra.mxu0 0
    %241 = vmatprep.subr.bf16.mxu0 0
    %242 = vmatpush2.bf16.msra.mxu0 0
    %243 = vmatprep.subr.bf16.mxu0 0
    %244 = vmatpush2.bf16.msra.mxu0 0
    %245 = vmatprep.subr.bf16.mxu0 0
    %246 = vmatpush2.bf16.msra.mxu0 0
    %247 = vmatprep.subr.bf16.mxu0 0
    %248 = vmatpush2.bf16.msra.mxu0 0
    %249 = vmatprep.subr.bf16.mxu0 0
    %250 = vmatpush2.bf16.msra.mxu0 0
    %251 = vmatprep.subr.bf16.mxu0 0
    %252 = vmatpush2.bf16.msra.mxu0 0
    %253 = vmatprep.mubr.bf16.mxu0 0
    %254 = vmatmul.mubr.bf16.gmra.mxu0 %v147
    %v255 = vpop.f32.mrf.mxu0
    %v256 = vadd.f32 %v171, %v255
    %v257 = vpop.f32.mrf.mxu0
    %v258 = vpop.f32.mrf.mxu0
    %v259 = vpop.f32.mrf.mxu0
    %260 = vdwg.mxu0
    %v261 = vmul.f32 %v256, 0.5
    %v262 = vtanh.pop %v261
    %v263 = vadd.f32 %v262, 1.0
    %v264 = vmul.f32 %v263, 0.5
    %v265 = vpack.c.bf16 %v264, %v264
    %s266 = scalar_lea.vmem [#allocation2], 128
    %v267 = vld [vmem:[%s266] sm:$0xf]
    %v268 = vld [vmem:[%s266 + $0x4] sm:$0xf]
    %v269 = vld [vmem:[%s266 + $0x8] sm:$0xf]
    %v270 = vld [vmem:[%s266 + $0xc] sm:$0xf]
    %v271 = vld [vmem:[%s266 + $0x10] sm:$0xf]
    %v272 = vld [vmem:[%s266 + $0x14] sm:$0xf]
    %v273 = vld [vmem:[%s266 + $0x18] sm:$0xf]
    %v274 = vld [vmem:[%s266 + $0x1c] sm:$0xf]
    %v275 = vld [vmem:[%s266 + $0x20] sm:$0xf]
    %v276 = vld [vmem:[%s266 + $0x24] sm:$0xf]
    %v277 = vld [vmem:[%s266 + $0x28] sm:$0xf]
    %v278 = vld [vmem:[%s266 + $0x2c] sm:$0xf]
    %v279 = vld [vmem:[%s266 + $0x30] sm:$0xf]
    %v280 = vld [vmem:[%s266 + $0x34] sm:$0xf]
    %v281 = vld [vmem:[%s266 + $0x38] sm:$0xf]
    %v282 = vld [vmem:[%s266 + $0x3c] sm:$0xf]
    %s283 = scalar_lea.vmem %s2, 2
    %v284 = vld [vmem:[%s283] sm:$0x1]
    %v286 = vlaneseq
    %v287 = vshrl.u32 %v286, 7
    %v288 = vsub.s32 0, %v287
    %v289 = vrot.slane %v284, %v288
    %v307 = vunpack.c.l.b16 %v267
    %v308 = vunpack.c.l.b16 %v268
    %v309 = vunpack.c.l.b16 %v269
    %v310 = vunpack.c.l.b16 %v270
    %v311 = vunpack.c.l.b16 %v271
    %v312 = vunpack.c.l.b16 %v272
    %v313 = vunpack.c.l.b16 %v273
    %v314 = vunpack.c.l.b16 %v274
    %v315 = vunpack.c.l.b16 %v275
    %v316 = vunpack.c.l.b16 %v276
    %v317 = vunpack.c.l.b16 %v277
    %v318 = vunpack.c.l.b16 %v278
    %v319 = vunpack.c.l.b16 %v279
    %v320 = vunpack.c.l.b16 %v280
    %v321 = vunpack.c.l.b16 %v281
    %v322 = vunpack.c.l.b16 %v282
    %v323 = vpack.c.b16 %v308, %v307
    %v324 = vpack.c.b16 %v310, %v309
    %v325 = vpack.c.b16 %v312, %v311
    %v326 = vpack.c.b16 %v314, %v313
    %v327 = vpack.c.b16 %v316, %v315
    %v328 = vpack.c.b16 %v318, %v317
    %v329 = vpack.c.b16 %v320, %v319
    %v330 = vpack.c.b16 %v322, %v321
    %339 = vmatprep.subr.bf16.mxu0 0
    %340 = vmatpush1.bf16.msra.mxu0 %v330
    %341 = vmatprep.subr.bf16.mxu0 0
    %342 = vmatpush1.bf16.msra.mxu0 %v329
    %343 = vmatprep.subr.bf16.mxu0 0
    %344 = vmatpush1.bf16.msra.mxu0 %v328
    %345 = vmatprep.subr.bf16.mxu0 0
    %346 = vmatpush1.bf16.msra.mxu0 %v327
    %347 = vmatprep.subr.bf16.mxu0 0
    %348 = vmatpush1.bf16.msra.mxu0 %v326
    %349 = vmatprep.subr.bf16.mxu0 0
    %350 = vmatpush1.bf16.msra.mxu0 %v325
    %351 = vmatprep.subr.bf16.mxu0 0
    %352 = vmatpush1.bf16.msra.mxu0 %v324
    %353 = vmatprep.subr.bf16.mxu0 0
    %354 = vmatpush1.bf16.msra.mxu0 %v323
    %355 = vmatprep.subr.bf16.mxu0 0
    %356 = vmatpush2.bf16.msra.mxu0 0
    %357 = vmatprep.subr.bf16.mxu0 0
    %358 = vmatpush2.bf16.msra.mxu0 0
    %359 = vmatprep.subr.bf16.mxu0 0
    %360 = vmatpush2.bf16.msra.mxu0 0
    %361 = vmatprep.subr.bf16.mxu0 0
    %362 = vmatpush2.bf16.msra.mxu0 0
    %363 = vmatprep.subr.bf16.mxu0 0
    %364 = vmatpush2.bf16.msra.mxu0 0
    %365 = vmatprep.subr.bf16.mxu0 0
    %366 = vmatpush2.bf16.msra.mxu0 0
    %367 = vmatprep.subr.bf16.mxu0 0
    %368 = vmatpush2.bf16.msra.mxu0 0
    %369 = vmatprep.subr.bf16.mxu0 0
    %370 = vmatpush2.bf16.msra.mxu0 0
    %371 = vmatprep.mubr.bf16.mxu0 0
    %372 = vmatmul.mubr.bf16.gmra.mxu0 %v265
    %v373 = vpop.f32.mrf.mxu0
    %v374 = vadd.f32 %v289, %v373
    %v375 = vpop.f32.mrf.mxu0
    %v376 = vpop.f32.mrf.mxu0
    %v377 = vpop.f32.mrf.mxu0
    %378 = vdwg.mxu0
    %v379 = vmul.f32 %v374, 0.5
    %v380 = vtanh.pop %v379
    %v381 = vadd.f32 %v380, 1.0
    %v382 = vmul.f32 %v381, 0.5
    %v383 = vpack.c.bf16 %v382, %v382
    %s384 = scalar_lea.vmem [#allocation2], 192
    %v385 = vld [vmem:[%s384] sm:$0xf]
    %v386 = vld [vmem:[%s384 + $0x4] sm:$0xf]
    %v387 = vld [vmem:[%s384 + $0x8] sm:$0xf]
    %v388 = vld [vmem:[%s384 + $0xc] sm:$0xf]
    %v389 = vld [vmem:[%s384 + $0x10] sm:$0xf]
    %v390 = vld [vmem:[%s384 + $0x14] sm:$0xf]
    %v391 = vld [vmem:[%s384 + $0x18] sm:$0xf]
    %v392 = vld [vmem:[%s384 + $0x1c] sm:$0xf]
    %v393 = vld [vmem:[%s384 + $0x20] sm:$0xf]
    %v394 = vld [vmem:[%s384 + $0x24] sm:$0xf]
    %v395 = vld [vmem:[%s384 + $0x28] sm:$0xf]
    %v396 = vld [vmem:[%s384 + $0x2c] sm:$0xf]
    %v397 = vld [vmem:[%s384 + $0x30] sm:$0xf]
    %v398 = vld [vmem:[%s384 + $0x34] sm:$0xf]
    %v399 = vld [vmem:[%s384 + $0x38] sm:$0xf]
    %v400 = vld [vmem:[%s384 + $0x3c] sm:$0xf]
    %s401 = scalar_lea.vmem %s2, 3
    %v402 = vld [vmem:[%s401] sm:$0x1]
    %v404 = vlaneseq
    %v405 = vshrl.u32 %v404, 7
    %v406 = vsub.s32 0, %v405
    %v407 = vrot.slane %v402, %v406
    %v425 = vunpack.c.l.b16 %v385
    %v426 = vunpack.c.l.b16 %v386
    %v427 = vunpack.c.l.b16 %v387
    %v428 = vunpack.c.l.b16 %v388
    %v429 = vunpack.c.l.b16 %v389
    %v430 = vunpack.c.l.b16 %v390
    %v431 = vunpack.c.l.b16 %v391
    %v432 = vunpack.c.l.b16 %v392
    %v433 = vunpack.c.l.b16 %v393
    %v434 = vunpack.c.l.b16 %v394
    %v435 = vunpack.c.l.b16 %v395
    %v436 = vunpack.c.l.b16 %v396
    %v437 = vunpack.c.l.b16 %v397
    %v438 = vunpack.c.l.b16 %v398
    %v439 = vunpack.c.l.b16 %v399
    %v440 = vunpack.c.l.b16 %v400
    %v441 = vpack.c.b16 %v426, %v425
    %v442 = vpack.c.b16 %v428, %v427
    %v443 = vpack.c.b16 %v430, %v429
    %v444 = vpack.c.b16 %v432, %v431
    %v445 = vpack.c.b16 %v434, %v433
    %v446 = vpack.c.b16 %v436, %v435
    %v447 = vpack.c.b16 %v438, %v437
    %v448 = vpack.c.b16 %v440, %v439
    %457 = vmatprep.subr.bf16.mxu0 0
    %458 = vmatpush1.bf16.msra.mxu0 %v448
    %459 = vmatprep.subr.bf16.mxu0 0
    %460 = vmatpush1.bf16.msra.mxu0 %v447
    %461 = vmatprep.subr.bf16.mxu0 0
    %462 = vmatpush1.bf16.msra.mxu0 %v446
    %463 = vmatprep.subr.bf16.mxu0 0
    %464 = vmatpush1.bf16.msra.mxu0 %v445
    %465 = vmatprep.subr.bf16.mxu0 0
    %466 = vmatpush1.bf16.msra.mxu0 %v444
    %467 = vmatprep.subr.bf16.mxu0 0
    %468 = vmatpush1.bf16.msra.mxu0 %v443
    %469 = vmatprep.subr.bf16.mxu0 0
    %470 = vmatpush1.bf16.msra.mxu0 %v442
    %471 = vmatprep.subr.bf16.mxu0 0
    %472 = vmatpush1.bf16.msra.mxu0 %v441
    %473 = vmatprep.subr.bf16.mxu0 0
    %474 = vmatpush2.bf16.msra.mxu0 0
    %475 = vmatprep.subr.bf16.mxu0 0
    %476 = vmatpush2.bf16.msra.mxu0 0
    %477 = vmatprep.subr.bf16.mxu0 0
    %478 = vmatpush2.bf16.msra.mxu0 0
    %479 = vmatprep.subr.bf16.mxu0 0
    %480 = vmatpush2.bf16.msra.mxu0 0
    %481 = vmatprep.subr.bf16.mxu0 0
    %482 = vmatpush2.bf16.msra.mxu0 0
    %483 = vmatprep.subr.bf16.mxu0 0
    %484 = vmatpush2.bf16.msra.mxu0 0
    %485 = vmatprep.subr.bf16.mxu0 0
    %486 = vmatpush2.bf16.msra.mxu0 0
    %487 = vmatprep.subr.bf16.mxu0 0
    %488 = vmatpush2.bf16.msra.mxu0 0
    %489 = vmatprep.mubr.bf16.mxu0 0
    %490 = vmatmul.mubr.bf16.gmra.mxu0 %v383
    %v491 = vpop.f32.mrf.mxu0
    %v492 = vadd.f32 %v407, %v491
    %v493 = vpop.f32.mrf.mxu0
    %v494 = vpop.f32.mrf.mxu0
    %v495 = vpop.f32.mrf.mxu0
    %496 = vdwg.mxu0
    %v497 = vmul.f32 %v492, 0.5
    %v498 = vtanh.pop %v497
    %v499 = vadd.f32 %v498, 1.0
    %v500 = vmul.f32 %v499, 0.5
    %501 = vst [vmem:[#allocation5] sm:$0xff] %v500
    // Predicated region
    $region18: #{feedforward_nn.1} parent=1 // pred_check
      _
    $region19: #{feedforward_nn.1} parent=1 // pred_check_branch
      %503 = sbr.rel (0) target = $region21
    $region20: #{feedforward_nn.1} parent=1 // pred_region
      %s505 = ssub.s32 128, 128
      %506 = vsyncadd [#allocation4], %s505
      %s508 = sshll.u32 [#allocation5], 4
      %s509 = int_to_ptr.vmem [resolvable:$true] %s508
      %511 = dma.vmem_to_hbm [thread:$0]  %s509, 128, %s3, [#allocation4]
    $region21: #{feedforward_nn.1} parent=1 // pred_fallthru
      _
    // Predicated region
    $region22: #{feedforward_nn.1} parent=1 // pred_check
      _
    $region23: #{feedforward_nn.1} parent=1 // pred_check_branch
      %513 = sbr.rel (0) target = $region25
    $region24: #{feedforward_nn.1} parent=1 // pred_region
      %514 = dma.done [#allocation4], 128
    $region25: #{feedforward_nn.1} parent=1 // pred_fallthru
      _
    %515 = vsyncpa [#allocation3], 1
    %516 = vsyncpa [#allocation4], 1

</llo_original>
